<compile_context>
chip_gen: v5e
topology: v5e:2x2
jax: 0.10.0
libtpu: 0.0.40
codegen_flags: <defaults>
</compile_context>

<pallas_src>
import functools
import math

import jax
import jax.numpy as jnp
from jax import lax
from jax.experimental import pallas as pl
from jax.experimental.pallas import tpu as pltpu


def _aug_cheb_kernel(y_ref, a_ref, b_ref, o_ref, *, beta, pseudo, negate, chunk):
    # y_ref: (TP, M)   objective values, points on sublanes, objectives on lanes
    # a_ref: (M, WR)   a[m, s] = sgn * weights[w, m] * ref[r, m],  s = w*R + r
    # b_ref: (M, WR)   b[m, s] = sgn * weights[w, m]
    # o_ref: (TP, WR)  scalarized values, output orientation (no transpose needed)
    tp, M = y_ref.shape
    WR = a_ref.shape[1]

    sign = -1.0 if negate else 1.0
    s_beta = sign * beta                      # constants folded at trace time

    # Hoist per-objective parameter rows out of the chunk loop (JAX does not CSE
    # broadcast_in_dim; these (1, WR) rows stay vreg-resident for every chunk).
    a_rows = tuple(a_ref[pl.ds(m, 1), :] for m in range(M))   # each (1, WR)
    b_rows = tuple(b_ref[pl.ds(m, 1), :] for m in range(M))   # each (1, WR)

    def chunk_body(c, carry):
        start = pl.multiple_of(c * chunk, chunk)
        y_blk = y_ref[pl.ds(start, chunk), :]                 # (chunk, M)
        ext = None   # running max (min if pseudo) over objectives
        tot = None   # running sum over objectives (L1 penalty)
        for m in range(M):                                    # M small & static
            y_m = y_blk[:, m:m + 1]                           # (chunk, 1)
            wd = a_rows[m] - b_rows[m] * y_m                  # (chunk, WR) = w*residual
            if m == 0:
                ext, tot = wd, wd
            else:
                ext = jnp.minimum(ext, wd) if pseudo else jnp.maximum(ext, wd)
                tot = tot + wd
        out = sign * ext + s_beta * tot                       # (chunk, WR)
        o_ref[pl.ds(start, chunk), :] = out.astype(o_ref.dtype)
        return carry

    lax.fori_loop(0, tp // chunk, chunk_body, 0)


def augmented_chebyshev_scalarization(Y, weights, ref_points, *, beta=0.05,
                                      invert=False, pseudo=False, negate=True,
                                      tile_points=4096, chunk_points=128,
                                      out_dtype=jnp.float32):
    """Y: (*batch, N, M), weights: (W, M), ref_points: (R, M) -> (*batch, N, W*R)."""
    # TODO(synk): batched weights/ref_points (extra leading batch dims) are not
    # supported by this wrapper; only the common 2-D parameter case is handled.
    assert Y.ndim >= 2
    if weights.ndim == 1:
        weights = weights[None, :]
    if ref_points.ndim == 1:
        ref_points = ref_points[None, :]

    M = Y.shape[-1]
    W, Mw = weights.shape
    R, Mr = ref_points.shape
    assert Mw == M and Mr == M
    WR = W * R
    P = int(math.prod(Y.shape[:-1]))          # all batch dims x num_points

    # Expanded parameter tables, scalar index s = w*R + r (matches torch.flatten).
    s_inv = -1.0 if invert else 1.0           # residual = s_inv * (ref - Y)
    w_exp = jnp.broadcast_to(weights[:, None, :], (W, R, M)).reshape(WR, M)
    r_exp = jnp.broadcast_to(ref_points[None, :, :], (W, R, M)).reshape(WR, M)
    a_tbl = (s_inv * w_exp * r_exp).astype(jnp.float32).T      # (M, WR)
    b_tbl = (s_inv * w_exp).astype(jnp.float32).T              # (M, WR)
    # wd = a - b * y  ==  weights * (s_inv * (ref - y))

    # Tile / chunk selection.  chunk = inner vreg-resident point block; the DMA
    # tile tp is a multiple of chunk so every grid block divides cleanly.
    chunk = max(8, (int(chunk_points) // 8) * 8)
    tp = max(chunk, (int(tile_points) // chunk) * chunk)
    if P > 2 * chunk:
        # Keep at least 2 grid steps when there is enough work, so the
        # "parallel" point axis can shard across both TensorCores on v7x.
        half = ((pl.cdiv(P, 2) + chunk - 1) // chunk) * chunk
        tp = min(tp, half)
    p_ceil = ((max(P, 1) + chunk - 1) // chunk) * chunk
    tp = min(tp, p_ceil)                       # no oversized single tile
    grid_n = pl.cdiv(max(P, 1), tp)
    P_pad = grid_n * tp                        # all blocks full; no partial tail

    y2 = Y.reshape(P, M).astype(jnp.float32)
    if P_pad > P:                              # pad rows are computed then dropped
        y2 = jnp.pad(y2, ((0, P_pad - P), (0, 0)))

    cost = pl.CostEstimate(
        flops=int(4 * M * WR * P_pad),
        transcendentals=0,
        bytes_accessed=int(4 * (P_pad * M + 2 * M * WR)
                           + jnp.dtype(out_dtype).itemsize * P_pad * WR))

    out_pad = pl.pallas_call(
        functools.partial(_aug_cheb_kernel, beta=float(beta),
                          pseudo=bool(pseudo), negate=bool(negate), chunk=chunk),
        out_shape=jax.ShapeDtypeStruct((P_pad, WR), out_dtype),
        grid_spec=pltpu.PrefetchScalarGridSpec(
            num_scalar_prefetch=0,
            grid=(grid_n,),
            in_specs=[
                pl.BlockSpec((tp, M), lambda p: (p, 0)),     # points on sublanes
                pl.BlockSpec((M, WR), lambda p: (0, 0)),     # grid-resident table
                pl.BlockSpec((M, WR), lambda p: (0, 0)),     # grid-resident table
            ],
            out_specs=pl.BlockSpec((tp, WR), lambda p: (p, 0)),
        ),
        compiler_params=pltpu.CompilerParams(
            dimension_semantics=("parallel",),
            vmem_limit_bytes=48 * 1024 * 1024),
        cost_estimate=cost,
    )(y2, a_tbl, b_tbl)

    out = out_pad[:P] if P_pad > P else out_pad
    return out.reshape(Y.shape[:-1] + (WR,))   # free metadata reshape


def augmented_chebyshev_ref(Y, weights, ref_points, beta=0.05, invert=False,
                            pseudo=False, negate=True):
    """Pure-JAX reference mirroring the PyTorch forward."""
    sign = -1.0 if negate else 1.0
    s_inv = -1.0 if invert else 1.0
    diff = s_inv * (ref_points[None, None, :, :] - Y[..., :, None, :])     # (B,N,R,M)
    wd = weights[None, None, :, None, :] * diff[..., None, :, :]           # (B,N,W,R,M)
    penalty = jnp.sum(wd, axis=-1)
    ext = jnp.min(wd, axis=-1) if pseudo else jnp.max(wd, axis=-1)
    out = sign * (ext + beta * penalty)                                    # (B,N,W,R)
    return out.reshape(out.shape[:-2] + (-1,))                             # (B,N,W*R)


if __name__ == "__main__":
    key = jax.random.PRNGKey(0)
    k_y, k_w, k_r, k_y2 = jax.random.split(key, 4)

    # Config 1: defaults, P divides the tile exactly.
    B, N, M = 2, 128, 4      # batch, num_points, num_objectives
    W, R = 8, 4              # num_weights, num_ref
    Y = jax.random.normal(k_y, (B, N, M), dtype=jnp.float32)
    weights = jax.random.uniform(k_w, (W, M), minval=0.1, maxval=1.0,
                                 dtype=jnp.float32)
    ref_points = jax.random.normal(k_r, (R, M), dtype=jnp.float32) + 1.0

    out = augmented_chebyshev_scalarization(Y, weights, ref_points)
    out = jax.block_until_ready(out)
    expected = augmented_chebyshev_ref(Y, weights, ref_points)
    assert out.shape == (B, N, W * R), out.shape
    assert jnp.allclose(out, expected, rtol=1e-4, atol=1e-5), (
        "mismatch vs reference (config 1), max abs err = "
        + str(float(jnp.max(jnp.abs(out - expected)))))

    # Config 2: non-divisible P (exercises padding + 2-step grid) and the
    # pseudo / invert / negate=False branches.
    B2, N2 = 1, 300
    Y2 = jax.random.normal(k_y2, (B2, N2, M), dtype=jnp.float32)
    out2 = augmented_chebyshev_scalarization(
        Y2, weights, ref_points, beta=0.1, invert=True, pseudo=True,
        negate=False)
    out2 = jax.block_until_ready(out2)
    expected2 = augmented_chebyshev_ref(
        Y2, weights, ref_points, beta=0.1, invert=True, pseudo=True,
        negate=False)
    assert out2.shape == (B2, N2, W * R), out2.shape
    assert jnp.allclose(out2, expected2, rtol=1e-4, atol=1e-5), (
        "mismatch vs reference (config 2), max abs err = "
        + str(float(jnp.max(jnp.abs(out2 - expected2)))))

    print("KERNEL_OK")
</pallas_src>

<mosaic_0001>
module attributes {stable_mosaic.version = 11 : i64} {
  func.func @_aug_cheb_kernel(%arg0: i32, %arg1: memref<256x4xf32, #tpu.memory_space<vmem>>, %arg2: memref<4x32xf32, #tpu.memory_space<vmem>>, %arg3: memref<4x32xf32, #tpu.memory_space<vmem>>, %arg4: memref<256x32xf32, #tpu.memory_space<vmem>>) attributes {dimension_semantics = [#tpu.dimension_semantics<parallel>], iteration_bounds = array<i64: 1>, scalar_prefetch = 0 : i64, scratch_operands = 0 : i64, tpu.core_type = #tpu.core_type<tc>, window_params = [{transform_indices = @transform_0, window_bounds = array<i64: 256, 4>}, {pipeline_mode = #tpu.pipeline_mode<synchronous>, transform_indices = @transform_1, window_bounds = array<i64: 4, 32>}, {pipeline_mode = #tpu.pipeline_mode<synchronous>, transform_indices = @transform_2, window_bounds = array<i64: 4, 32>}, {transform_indices = @transform_3, window_bounds = array<i64: 256, 32>}]} {
    %c0 = arith.constant 0 : index
    %c0_0 = arith.constant 0 : index
    %0 = vector.load %arg2[%c0, %c0_0] : memref<4x32xf32, #tpu.memory_space<vmem>>, vector<1x32xf32>
    %c1 = arith.constant 1 : index
    %c0_1 = arith.constant 0 : index
    %1 = vector.load %arg2[%c1, %c0_1] : memref<4x32xf32, #tpu.memory_space<vmem>>, vector<1x32xf32>
    %c2 = arith.constant 2 : index
    %c0_2 = arith.constant 0 : index
    %2 = vector.load %arg2[%c2, %c0_2] : memref<4x32xf32, #tpu.memory_space<vmem>>, vector<1x32xf32>
    %c3 = arith.constant 3 : index
    %c0_3 = arith.constant 0 : index
    %3 = vector.load %arg2[%c3, %c0_3] : memref<4x32xf32, #tpu.memory_space<vmem>>, vector<1x32xf32>
    %c0_4 = arith.constant 0 : index
    %c0_5 = arith.constant 0 : index
    %4 = vector.load %arg3[%c0_4, %c0_5] : memref<4x32xf32, #tpu.memory_space<vmem>>, vector<1x32xf32>
    %c1_6 = arith.constant 1 : index
    %c0_7 = arith.constant 0 : index
    %5 = vector.load %arg3[%c1_6, %c0_7] : memref<4x32xf32, #tpu.memory_space<vmem>>, vector<1x32xf32>
    %c2_8 = arith.constant 2 : index
    %c0_9 = arith.constant 0 : index
    %6 = vector.load %arg3[%c2_8, %c0_9] : memref<4x32xf32, #tpu.memory_space<vmem>>, vector<1x32xf32>
    %c3_10 = arith.constant 3 : index
    %c0_11 = arith.constant 0 : index
    %7 = vector.load %arg3[%c3_10, %c0_11] : memref<4x32xf32, #tpu.memory_space<vmem>>, vector<1x32xf32>
    %c0_i32 = arith.constant 0 : i32
    %c2_i32 = arith.constant 2 : i32
    %8 = arith.addi %c0_i32, %c2_i32 : i32
    %c1_i32 = arith.constant 1 : i32
    scf.for %arg5 = %c0_i32 to %8 step %c1_i32  : i32 {
      %c128_i32 = arith.constant 128 : i32
      %9 = arith.muli %arg5, %c128_i32 : i32
      %10 = tpu.assume_multiple %9, 128 : i32
      %11 = arith.index_cast %10 : i32 to index
      %c0_13 = arith.constant 0 : index
      %12 = vector.load %arg1[%11, %c0_13] : memref<256x4xf32, #tpu.memory_space<vmem>>, vector<128x4xf32>
      %13 = vector.extract_strided_slice %12 {offsets = [0, 0], sizes = [128, 1], strides = [1, 1]} : vector<128x4xf32> to vector<128x1xf32>
      %14 = vector.broadcast %4 : vector<1x32xf32> to vector<128x32xf32>
      %15 = vector.broadcast %13 : vector<128x1xf32> to vector<128x32xf32>
      %16 = arith.mulf %14, %15 : vector<128x32xf32>
      %17 = vector.broadcast %0 : vector<1x32xf32> to vector<128x32xf32>
      %18 = arith.subf %17, %16 : vector<128x32xf32>
      %19 = vector.extract_strided_slice %12 {offsets = [0, 1], sizes = [128, 1], strides = [1, 1]} : vector<128x4xf32> to vector<128x1xf32>
      %20 = vector.broadcast %5 : vector<1x32xf32> to vector<128x32xf32>
      %21 = vector.broadcast %19 : vector<128x1xf32> to vector<128x32xf32>
      %22 = arith.mulf %20, %21 : vector<128x32xf32>
      %23 = vector.broadcast %1 : vector<1x32xf32> to vector<128x32xf32>
      %24 = arith.subf %23, %22 : vector<128x32xf32>
      %25 = arith.maximumf %18, %24 : vector<128x32xf32>
      %26 = arith.addf %18, %24 : vector<128x32xf32>
      %27 = vector.extract_strided_slice %12 {offsets = [0, 2], sizes = [128, 1], strides = [1, 1]} : vector<128x4xf32> to vector<128x1xf32>
      %28 = vector.broadcast %6 : vector<1x32xf32> to vector<128x32xf32>
      %29 = vector.broadcast %27 : vector<128x1xf32> to vector<128x32xf32>
      %30 = arith.mulf %28, %29 : vector<128x32xf32>
      %31 = vector.broadcast %2 : vector<1x32xf32> to vector<128x32xf32>
      %32 = arith.subf %31, %30 : vector<128x32xf32>
      %33 = arith.maximumf %25, %32 : vector<128x32xf32>
      %34 = arith.addf %26, %32 : vector<128x32xf32>
      %35 = vector.extract_strided_slice %12 {offsets = [0, 3], sizes = [128, 1], strides = [1, 1]} : vector<128x4xf32> to vector<128x1xf32>
      %36 = vector.broadcast %7 : vector<1x32xf32> to vector<128x32xf32>
      %37 = vector.broadcast %35 : vector<128x1xf32> to vector<128x32xf32>
      %38 = arith.mulf %36, %37 : vector<128x32xf32>
      %39 = vector.broadcast %3 : vector<1x32xf32> to vector<128x32xf32>
      %40 = arith.subf %39, %38 : vector<128x32xf32>
      %41 = arith.maximumf %33, %40 : vector<128x32xf32>
      %42 = arith.addf %34, %40 : vector<128x32xf32>
      %cst = arith.constant -1.000000e+00 : f32
      %43 = vector.broadcast %cst : f32 to vector<128x32xf32>
      %44 = arith.mulf %43, %41 : vector<128x32xf32>
      %cst_14 = arith.constant -5.000000e-02 : f32
      %45 = vector.broadcast %cst_14 : f32 to vector<128x32xf32>
      %46 = arith.mulf %45, %42 : vector<128x32xf32>
      %47 = arith.addf %44, %46 : vector<128x32xf32>
      %48 = arith.index_cast %10 : i32 to index
      %c0_15 = arith.constant 0 : index
      %49 = vector.load %arg4[%48, %c0_15] : memref<256x32xf32, #tpu.memory_space<vmem>>, vector<128x32xf32>
      tpu.vector_store %arg4[%48, %c0_15], %47 {strides = array<i32>} : memref<256x32xf32, #tpu.memory_space<vmem>>, vector<128x32xf32>,
    }
    %c2_i32_12 = arith.constant 2 : i32
    return
  }
  func.func @transform_0(%arg0: i32) -> (i32, i32) {
    %c0_i32 = arith.constant 0 : i32
    %c0_i32_0 = arith.constant 0 : i32
    return %arg0, %c0_i32 : i32, i32
  }
  func.func @transform_1(%arg0: i32) -> (i32, i32) {
    %c0_i32 = arith.constant 0 : i32
    %c0_i32_0 = arith.constant 0 : i32
    %c0_i32_1 = arith.constant 0 : i32
    return %c0_i32, %c0_i32_0 : i32, i32
  }
  func.func @transform_2(%arg0: i32) -> (i32, i32) {
    %c0_i32 = arith.constant 0 : i32
    %c0_i32_0 = arith.constant 0 : i32
    %c0_i32_1 = arith.constant 0 : i32
    return %c0_i32, %c0_i32_0 : i32, i32
  }
  func.func @transform_3(%arg0: i32) -> (i32, i32) {
    %c0_i32 = arith.constant 0 : i32
    %c0_i32_0 = arith.constant 0 : i32
    return %arg0, %c0_i32 : i32, i32
  }
}

</mosaic_0001>

<llo_original>
// kernel: tpu_custom_call.1
$region0: #{tpu_custom_call.1}
  #allocation0 [shape = 'u32[]', space=smem, size = 0x4, offset = 0x4, fixed_abs, tag = 'smem constant byte address 0x4 - core index']
  #allocation1 [shape = 'u32[72,128]{1,0:T(1,128)}', space=vmem, size = 0x9000, scoped, tag = 'internal scratch']
  %s0 = inlined_call_operand.vmem [shape: f32[256,4], index: 0, kind: input, shape index: {}]
  %s1 = inlined_call_operand.vmem [shape: f32[4,32], index: 1, kind: input, shape index: {}]
  %s2 = inlined_call_operand.vmem [shape: f32[4,32], index: 2, kind: input, shape index: {}]
  %s3 = inlined_call_operand.vmem [shape: f32[256,32], index: 3, kind: output, shape index: {}]
  %s4 = sld [smem:[#allocation0]]
  $region29: #{tpu_custom_call.1} parent=0
    _
  %s6 = ssub.s32 1, %s4
  %s7 = scalar_select 0, %s6, %s4
  // Predicated region
  $region2: #{tpu_custom_call.1} parent=0 // pred_check
    _
  $region3: #{tpu_custom_call.1} parent=0 // pred_check_branch
    %9 = sbr.rel (0) target = $region5
  $region4: #{tpu_custom_call.1} parent=0 // pred_region
    _
  $region5: #{tpu_custom_call.1} parent=0 // pred_fallthru
    _
  // Predicated region
  $region6: #{tpu_custom_call.1} parent=0 // pred_check
    _
  $region7: #{tpu_custom_call.1} parent=0 // pred_check_branch
    %11 = sbr.rel (0) target = $region9
  $region8: #{tpu_custom_call.1} parent=0 // pred_region
    _
  $region9: #{tpu_custom_call.1} parent=0 // pred_fallthru
    _
  // Predicated region
  $region10: #{tpu_custom_call.1} parent=0 // pred_check
    _
  $region11: #{tpu_custom_call.1} parent=0 // pred_check_branch
    %13 = sbr.rel (0) target = $region13
  $region12: #{tpu_custom_call.1} parent=0 // pred_region
    _
  $region13: #{tpu_custom_call.1} parent=0 // pred_fallthru
    _
  %v14 = vld [vmem:[%s1] sm:$0x1]
  %v15 = vld [vmem:[%s1 + $0x1] sm:$0x1]
  %v16 = vld [vmem:[%s1 + $0x2] sm:$0x1]
  %v17 = vld [vmem:[%s1 + $0x3] sm:$0x1]
  %v18 = vld [vmem:[%s2] sm:$0x1]
  %v19 = vld [vmem:[%s2 + $0x1] sm:$0x1]
  %v20 = vld [vmem:[%s2 + $0x2] sm:$0x1]
  %v21 = vld [vmem:[%s2 + $0x3] sm:$0x1]
  loop: start=0, step=1, limit=2
  $region14: #{tpu_custom_call.1} parent=0 // loop_pre_header
    _
  $region15: #{tpu_custom_call.1} parent=0 // loop_header
    %s23 = sphi 0, %s27
    %p24 = scmp.ge.s32.totalorder %s23, 2
  $region16: #{tpu_custom_call.1} parent=0 // loop_header_branch
    %26 = sbr.rel (%p24) target = $region20
  $region17: #{tpu_custom_call.1} parent=0 // loop_body
    %s28 = smul.u32 %s23, 128
    %s29 = scalar_lea.vmem %s0, %s28
    %v30 = vld [vmem:[%s29] sm:$0xff]
    %v31 = vld [vmem:[%s29 + $0x8] sm:$0xff]
    %v32 = vld [vmem:[%s29 + $0x10] sm:$0xff]
    %v33 = vld [vmem:[%s29 + $0x18] sm:$0xff]
    %v34 = vld [vmem:[%s29 + $0x20] sm:$0xff]
    %v35 = vld [vmem:[%s29 + $0x28] sm:$0xff]
    %v36 = vld [vmem:[%s29 + $0x30] sm:$0xff]
    %v37 = vld [vmem:[%s29 + $0x38] sm:$0xff]
    %v38 = vld [vmem:[%s29 + $0x40] sm:$0xff]
    %v39 = vld [vmem:[%s29 + $0x48] sm:$0xff]
    %v40 = vld [vmem:[%s29 + $0x50] sm:$0xff]
    %v41 = vld [vmem:[%s29 + $0x58] sm:$0xff]
    %v42 = vld [vmem:[%s29 + $0x60] sm:$0xff]
    %v43 = vld [vmem:[%s29 + $0x68] sm:$0xff]
    %v44 = vld [vmem:[%s29 + $0x70] sm:$0xff]
    %v45 = vld [vmem:[%s29 + $0x78] sm:$0xff]
    %v46 = vperm.slane %v18, 0
    %48 = vset.pattern.permute.xlu0 0
    %49 = vperm.xlu0 %48, %v30
    %v50 = vpop.permute.xlu0 %49
    %53 = vset.pattern.permute.xlu0 0
    %54 = vperm.xlu0 %53, %v31
    %v55 = vpop.permute.xlu0 %54
    %58 = vset.pattern.permute.xlu0 0
    %59 = vperm.xlu0 %58, %v32
    %v60 = vpop.permute.xlu0 %59
    %63 = vset.pattern.permute.xlu0 0
    %64 = vperm.xlu0 %63, %v33
    %v65 = vpop.permute.xlu0 %64
    %68 = vset.pattern.permute.xlu0 0
    %69 = vperm.xlu0 %68, %v34
    %v70 = vpop.permute.xlu0 %69
    %73 = vset.pattern.permute.xlu0 0
    %74 = vperm.xlu0 %73, %v35
    %v75 = vpop.permute.xlu0 %74
    %78 = vset.pattern.permute.xlu0 0
    %79 = vperm.xlu0 %78, %v36
    %v80 = vpop.permute.xlu0 %79
    %83 = vset.pattern.permute.xlu0 0
    %84 = vperm.xlu0 %83, %v37
    %v85 = vpop.permute.xlu0 %84
    %88 = vset.pattern.permute.xlu0 0
    %89 = vperm.xlu0 %88, %v38
    %v90 = vpop.permute.xlu0 %89
    %93 = vset.pattern.permute.xlu0 0
    %94 = vperm.xlu0 %93, %v39
    %v95 = vpop.permute.xlu0 %94
    %98 = vset.pattern.permute.xlu0 0
    %99 = vperm.xlu0 %98, %v40
    %v100 = vpop.permute.xlu0 %99
    %103 = vset.pattern.permute.xlu0 0
    %104 = vperm.xlu0 %103, %v41
    %v105 = vpop.permute.xlu0 %104
    %108 = vset.pattern.permute.xlu0 0
    %109 = vperm.xlu0 %108, %v42
    %v110 = vpop.permute.xlu0 %109
    %113 = vset.pattern.permute.xlu0 0
    %114 = vperm.xlu0 %113, %v43
    %v115 = vpop.permute.xlu0 %114
    %118 = vset.pattern.permute.xlu0 0
    %119 = vperm.xlu0 %118, %v44
    %v120 = vpop.permute.xlu0 %119
    %123 = vset.pattern.permute.xlu0 0
    %124 = vperm.xlu0 %123, %v45
    %v125 = vpop.permute.xlu0 %124
    %v127 = vmul.f32 %v46, %v50
    %v128 = vmul.f32 %v46, %v55
    %v129 = vmul.f32 %v46, %v60
    %v130 = vmul.f32 %v46, %v65
    %v131 = vmul.f32 %v46, %v70
    %v132 = vmul.f32 %v46, %v75
    %v133 = vmul.f32 %v46, %v80
    %v134 = vmul.f32 %v46, %v85
    %v135 = vmul.f32 %v46, %v90
    %v136 = vmul.f32 %v46, %v95
    %v137 = vmul.f32 %v46, %v100
    %v138 = vmul.f32 %v46, %v105
    %v139 = vmul.f32 %v46, %v110
    %v140 = vmul.f32 %v46, %v115
    %v141 = vmul.f32 %v46, %v120
    %v142 = vmul.f32 %v46, %v125
    %v143 = vperm.slane %v14, 0
    %v144 = vsub.f32 %v143, %v127
    %v145 = vsub.f32 %v143, %v128
    %v146 = vsub.f32 %v143, %v129
    %v147 = vsub.f32 %v143, %v130
    %v148 = vsub.f32 %v143, %v131
    %v149 = vsub.f32 %v143, %v132
    %v150 = vsub.f32 %v143, %v133
    %v151 = vsub.f32 %v143, %v134
    %v152 = vsub.f32 %v143, %v135
    %v153 = vsub.f32 %v143, %v136
    %v154 = vsub.f32 %v143, %v137
    %v155 = vsub.f32 %v143, %v138
    %v156 = vsub.f32 %v143, %v139
    %v157 = vsub.f32 %v143, %v140
    %v158 = vsub.f32 %v143, %v141
    %v159 = vsub.f32 %v143, %v142
    %v160 = vperm.slane %v19, 0
    %161 = vset.pattern.permute.xlu0 1
    %162 = vperm.xlu0 %161, %v30
    %v163 = vpop.permute.xlu0 %162
    %165 = vset.pattern.permute.xlu0 1
    %166 = vperm.xlu0 %165, %v31
    %v167 = vpop.permute.xlu0 %166
    %169 = vset.pattern.permute.xlu0 1
    %170 = vperm.xlu0 %169, %v32
    %v171 = vpop.permute.xlu0 %170
    %173 = vset.pattern.permute.xlu0 1
    %174 = vperm.xlu0 %173, %v33
    %v175 = vpop.permute.xlu0 %174
    %177 = vset.pattern.permute.xlu0 1
    %178 = vperm.xlu0 %177, %v34
    %v179 = vpop.permute.xlu0 %178
    %181 = vset.pattern.permute.xlu0 1
    %182 = vperm.xlu0 %181, %v35
    %v183 = vpop.permute.xlu0 %182
    %185 = vset.pattern.permute.xlu0 1
    %186 = vperm.xlu0 %185, %v36
    %v187 = vpop.permute.xlu0 %186
    %189 = vset.pattern.permute.xlu0 1
    %190 = vperm.xlu0 %189, %v37
    %v191 = vpop.permute.xlu0 %190
    %193 = vset.pattern.permute.xlu0 1
    %194 = vperm.xlu0 %193, %v38
    %v195 = vpop.permute.xlu0 %194
    %197 = vset.pattern.permute.xlu0 1
    %198 = vperm.xlu0 %197, %v39
    %v199 = vpop.permute.xlu0 %198
    %201 = vset.pattern.permute.xlu0 1
    %202 = vperm.xlu0 %201, %v40
    %v203 = vpop.permute.xlu0 %202
    %205 = vset.pattern.permute.xlu0 1
    %206 = vperm.xlu0 %205, %v41
    %v207 = vpop.permute.xlu0 %206
    %209 = vset.pattern.permute.xlu0 1
    %210 = vperm.xlu0 %209, %v42
    %v211 = vpop.permute.xlu0 %210
    %213 = vset.pattern.permute.xlu0 1
    %214 = vperm.xlu0 %213, %v43
    %v215 = vpop.permute.xlu0 %214
    %217 = vset.pattern.permute.xlu0 1
    %218 = vperm.xlu0 %217, %v44
    %v219 = vpop.permute.xlu0 %218
    %221 = vset.pattern.permute.xlu0 1
    %222 = vperm.xlu0 %221, %v45
    %v223 = vpop.permute.xlu0 %222
    %v225 = vmul.f32 %v160, %v163
    %v226 = vmul.f32 %v160, %v167
    %v227 = vmul.f32 %v160, %v171
    %v228 = vmul.f32 %v160, %v175
    %v229 = vmul.f32 %v160, %v179
    %v230 = vmul.f32 %v160, %v183
    %v231 = vmul.f32 %v160, %v187
    %v232 = vmul.f32 %v160, %v191
    %v233 = vmul.f32 %v160, %v195
    %v234 = vmul.f32 %v160, %v199
    %v235 = vmul.f32 %v160, %v203
    %v236 = vmul.f32 %v160, %v207
    %v237 = vmul.f32 %v160, %v211
    %v238 = vmul.f32 %v160, %v215
    %v239 = vmul.f32 %v160, %v219
    %v240 = vmul.f32 %v160, %v223
    %v241 = vperm.slane %v15, 0
    %v242 = vsub.f32 %v241, %v225
    %v243 = vsub.f32 %v241, %v226
    %v244 = vsub.f32 %v241, %v227
    %v245 = vsub.f32 %v241, %v228
    %v246 = vsub.f32 %v241, %v229
    %v247 = vsub.f32 %v241, %v230
    %v248 = vsub.f32 %v241, %v231
    %v249 = vsub.f32 %v241, %v232
    %v250 = vsub.f32 %v241, %v233
    %v251 = vsub.f32 %v241, %v234
    %v252 = vsub.f32 %v241, %v235
    %v253 = vsub.f32 %v241, %v236
    %v254 = vsub.f32 %v241, %v237
    %v255 = vsub.f32 %v241, %v238
    %v256 = vsub.f32 %v241, %v239
    %v257 = vsub.f32 %v241, %v240
    %v258 = vmax.f32 %v144, %v242
    %v259 = vmax.f32 %v145, %v243
    %v260 = vmax.f32 %v146, %v244
    %v261 = vmax.f32 %v147, %v245
    %v262 = vmax.f32 %v148, %v246
    %v263 = vmax.f32 %v149, %v247
    %v264 = vmax.f32 %v150, %v248
    %v265 = vmax.f32 %v151, %v249
    %v266 = vmax.f32 %v152, %v250
    %v267 = vmax.f32 %v153, %v251
    %v268 = vmax.f32 %v154, %v252
    %v269 = vmax.f32 %v155, %v253
    %v270 = vmax.f32 %v156, %v254
    %v271 = vmax.f32 %v157, %v255
    %v272 = vmax.f32 %v158, %v256
    %v273 = vmax.f32 %v159, %v257
    %v274 = vadd.f32 %v144, %v242
    %v275 = vadd.f32 %v145, %v243
    %v276 = vadd.f32 %v146, %v244
    %v277 = vadd.f32 %v147, %v245
    %v278 = vadd.f32 %v148, %v246
    %v279 = vadd.f32 %v149, %v247
    %v280 = vadd.f32 %v150, %v248
    %v281 = vadd.f32 %v151, %v249
    %v282 = vadd.f32 %v152, %v250
    %v283 = vadd.f32 %v153, %v251
    %v284 = vadd.f32 %v154, %v252
    %v285 = vadd.f32 %v155, %v253
    %v286 = vadd.f32 %v156, %v254
    %v287 = vadd.f32 %v157, %v255
    %v288 = vadd.f32 %v158, %v256
    %v289 = vadd.f32 %v159, %v257
    %v290 = vperm.slane %v20, 0
    %291 = vset.pattern.permute.xlu0 2
    %292 = vperm.xlu0 %291, %v30
    %v293 = vpop.permute.xlu0 %292
    %295 = vset.pattern.permute.xlu0 2
    %296 = vperm.xlu0 %295, %v31
    %v297 = vpop.permute.xlu0 %296
    %299 = vset.pattern.permute.xlu0 2
    %300 = vperm.xlu0 %299, %v32
    %v301 = vpop.permute.xlu0 %300
    %303 = vset.pattern.permute.xlu0 2
    %304 = vperm.xlu0 %303, %v33
    %v305 = vpop.permute.xlu0 %304
    %307 = vset.pattern.permute.xlu0 2
    %308 = vperm.xlu0 %307, %v34
    %v309 = vpop.permute.xlu0 %308
    %311 = vset.pattern.permute.xlu0 2
    %312 = vperm.xlu0 %311, %v35
    %v313 = vpop.permute.xlu0 %312
    %315 = vset.pattern.permute.xlu0 2
    %316 = vperm.xlu0 %315, %v36
    %v317 = vpop.permute.xlu0 %316
    %319 = vset.pattern.permute.xlu0 2
    %320 = vperm.xlu0 %319, %v37
    %v321 = vpop.permute.xlu0 %320
    %323 = vset.pattern.permute.xlu0 2
    %324 = vperm.xlu0 %323, %v38
    %v325 = vpop.permute.xlu0 %324
    %327 = vset.pattern.permute.xlu0 2
    %328 = vperm.xlu0 %327, %v39
    %v329 = vpop.permute.xlu0 %328
    %331 = vset.pattern.permute.xlu0 2
    %332 = vperm.xlu0 %331, %v40
    %v333 = vpop.permute.xlu0 %332
    %335 = vset.pattern.permute.xlu0 2
    %336 = vperm.xlu0 %335, %v41
    %v337 = vpop.permute.xlu0 %336
    %339 = vset.pattern.permute.xlu0 2
    %340 = vperm.xlu0 %339, %v42
    %v341 = vpop.permute.xlu0 %340
    %343 = vset.pattern.permute.xlu0 2
    %344 = vperm.xlu0 %343, %v43
    %v345 = vpop.permute.xlu0 %344
    %347 = vset.pattern.permute.xlu0 2
    %348 = vperm.xlu0 %347, %v44
    %v349 = vpop.permute.xlu0 %348
    %351 = vset.pattern.permute.xlu0 2
    %352 = vperm.xlu0 %351, %v45
    %v353 = vpop.permute.xlu0 %352
    %v355 = vmul.f32 %v290, %v293
    %v356 = vmul.f32 %v290, %v297
    %v357 = vmul.f32 %v290, %v301
    %v358 = vmul.f32 %v290, %v305
    %v359 = vmul.f32 %v290, %v309
    %v360 = vmul.f32 %v290, %v313
    %v361 = vmul.f32 %v290, %v317
    %v362 = vmul.f32 %v290, %v321
    %v363 = vmul.f32 %v290, %v325
    %v364 = vmul.f32 %v290, %v329
    %v365 = vmul.f32 %v290, %v333
    %v366 = vmul.f32 %v290, %v337
    %v367 = vmul.f32 %v290, %v341
    %v368 = vmul.f32 %v290, %v345
    %v369 = vmul.f32 %v290, %v349
    %v370 = vmul.f32 %v290, %v353
    %v371 = vperm.slane %v16, 0
    %v372 = vsub.f32 %v371, %v355
    %v373 = vsub.f32 %v371, %v356
    %v374 = vsub.f32 %v371, %v357
    %v375 = vsub.f32 %v371, %v358
    %v376 = vsub.f32 %v371, %v359
    %v377 = vsub.f32 %v371, %v360
    %v378 = vsub.f32 %v371, %v361
    %v379 = vsub.f32 %v371, %v362
    %v380 = vsub.f32 %v371, %v363
    %v381 = vsub.f32 %v371, %v364
    %v382 = vsub.f32 %v371, %v365
    %v383 = vsub.f32 %v371, %v366
    %v384 = vsub.f32 %v371, %v367
    %v385 = vsub.f32 %v371, %v368
    %v386 = vsub.f32 %v371, %v369
    %v387 = vsub.f32 %v371, %v370
    %v388 = vmax.f32 %v258, %v372
    %v389 = vmax.f32 %v259, %v373
    %v390 = vmax.f32 %v260, %v374
    %v391 = vmax.f32 %v261, %v375
    %v392 = vmax.f32 %v262, %v376
    %v393 = vmax.f32 %v263, %v377
    %v394 = vmax.f32 %v264, %v378
    %v395 = vmax.f32 %v265, %v379
    %v396 = vmax.f32 %v266, %v380
    %v397 = vmax.f32 %v267, %v381
    %v398 = vmax.f32 %v268, %v382
    %v399 = vmax.f32 %v269, %v383
    %v400 = vmax.f32 %v270, %v384
    %v401 = vmax.f32 %v271, %v385
    %v402 = vmax.f32 %v272, %v386
    %v403 = vmax.f32 %v273, %v387
    %v404 = vadd.f32 %v274, %v372
    %v405 = vadd.f32 %v275, %v373
    %v406 = vadd.f32 %v276, %v374
    %v407 = vadd.f32 %v277, %v375
    %v408 = vadd.f32 %v278, %v376
    %v409 = vadd.f32 %v279, %v377
    %v410 = vadd.f32 %v280, %v378
    %v411 = vadd.f32 %v281, %v379
    %v412 = vadd.f32 %v282, %v380
    %v413 = vadd.f32 %v283, %v381
    %v414 = vadd.f32 %v284, %v382
    %v415 = vadd.f32 %v285, %v383
    %v416 = vadd.f32 %v286, %v384
    %v417 = vadd.f32 %v287, %v385
    %v418 = vadd.f32 %v288, %v386
    %v419 = vadd.f32 %v289, %v387
    %v420 = vperm.slane %v21, 0
    %421 = vset.pattern.permute.xlu0 3
    %422 = vperm.xlu0 %421, %v30
    %v423 = vpop.permute.xlu0 %422
    %425 = vset.pattern.permute.xlu0 3
    %426 = vperm.xlu0 %425, %v31
    %v427 = vpop.permute.xlu0 %426
    %429 = vset.pattern.permute.xlu0 3
    %430 = vperm.xlu0 %429, %v32
    %v431 = vpop.permute.xlu0 %430
    %433 = vset.pattern.permute.xlu0 3
    %434 = vperm.xlu0 %433, %v33
    %v435 = vpop.permute.xlu0 %434
    %437 = vset.pattern.permute.xlu0 3
    %438 = vperm.xlu0 %437, %v34
    %v439 = vpop.permute.xlu0 %438
    %441 = vset.pattern.permute.xlu0 3
    %442 = vperm.xlu0 %441, %v35
    %v443 = vpop.permute.xlu0 %442
    %445 = vset.pattern.permute.xlu0 3
    %446 = vperm.xlu0 %445, %v36
    %v447 = vpop.permute.xlu0 %446
    %449 = vset.pattern.permute.xlu0 3
    %450 = vperm.xlu0 %449, %v37
    %v451 = vpop.permute.xlu0 %450
    %453 = vset.pattern.permute.xlu0 3
    %454 = vperm.xlu0 %453, %v38
    %v455 = vpop.permute.xlu0 %454
    %457 = vset.pattern.permute.xlu0 3
    %458 = vperm.xlu0 %457, %v39
    %v459 = vpop.permute.xlu0 %458
    %461 = vset.pattern.permute.xlu0 3
    %462 = vperm.xlu0 %461, %v40
    %v463 = vpop.permute.xlu0 %462
    %465 = vset.pattern.permute.xlu0 3
    %466 = vperm.xlu0 %465, %v41
    %v467 = vpop.permute.xlu0 %466
    %469 = vset.pattern.permute.xlu0 3
    %470 = vperm.xlu0 %469, %v42
    %v471 = vpop.permute.xlu0 %470
    %473 = vset.pattern.permute.xlu0 3
    %474 = vperm.xlu0 %473, %v43
    %v475 = vpop.permute.xlu0 %474
    %477 = vset.pattern.permute.xlu0 3
    %478 = vperm.xlu0 %477, %v44
    %v479 = vpop.permute.xlu0 %478
    %481 = vset.pattern.permute.xlu0 3
    %482 = vperm.xlu0 %481, %v45
    %v483 = vpop.permute.xlu0 %482
    %v485 = vmul.f32 %v420, %v423
    %v486 = vmul.f32 %v420, %v427
    %v487 = vmul.f32 %v420, %v431
    %v488 = vmul.f32 %v420, %v435
    %v489 = vmul.f32 %v420, %v439
    %v490 = vmul.f32 %v420, %v443
    %v491 = vmul.f32 %v420, %v447
    %v492 = vmul.f32 %v420, %v451
    %v493 = vmul.f32 %v420, %v455
    %v494 = vmul.f32 %v420, %v459
    %v495 = vmul.f32 %v420, %v463
    %v496 = vmul.f32 %v420, %v467
    %v497 = vmul.f32 %v420, %v471
    %v498 = vmul.f32 %v420, %v475
    %v499 = vmul.f32 %v420, %v479
    %v500 = vmul.f32 %v420, %v483
    %v501 = vperm.slane %v17, 0
    %v502 = vsub.f32 %v501, %v485
    %v503 = vsub.f32 %v501, %v486
    %v504 = vsub.f32 %v501, %v487
    %v505 = vsub.f32 %v501, %v488
    %v506 = vsub.f32 %v501, %v489
    %v507 = vsub.f32 %v501, %v490
    %v508 = vsub.f32 %v501, %v491
    %v509 = vsub.f32 %v501, %v492
    %v510 = vsub.f32 %v501, %v493
    %v511 = vsub.f32 %v501, %v494
    %v512 = vsub.f32 %v501, %v495
    %v513 = vsub.f32 %v501, %v496
    %v514 = vsub.f32 %v501, %v497
    %v515 = vsub.f32 %v501, %v498
    %v516 = vsub.f32 %v501, %v499
    %v517 = vsub.f32 %v501, %v500
    %v518 = vmax.f32 %v388, %v502
    %v519 = vmax.f32 %v389, %v503
    %v520 = vmax.f32 %v390, %v504
    %v521 = vmax.f32 %v391, %v505
    %v522 = vmax.f32 %v392, %v506
    %v523 = vmax.f32 %v393, %v507
    %v524 = vmax.f32 %v394, %v508
    %v525 = vmax.f32 %v395, %v509
    %v526 = vmax.f32 %v396, %v510
    %v527 = vmax.f32 %v397, %v511
    %v528 = vmax.f32 %v398, %v512
    %v529 = vmax.f32 %v399, %v513
    %v530 = vmax.f32 %v400, %v514
    %v531 = vmax.f32 %v401, %v515
    %v532 = vmax.f32 %v402, %v516
    %v533 = vmax.f32 %v403, %v517
    %v534 = vadd.f32 %v404, %v502
    %v535 = vadd.f32 %v405, %v503
    %v536 = vadd.f32 %v406, %v504
    %v537 = vadd.f32 %v407, %v505
    %v538 = vadd.f32 %v408, %v506
    %v539 = vadd.f32 %v409, %v507
    %v540 = vadd.f32 %v410, %v508
    %v541 = vadd.f32 %v411, %v509
    %v542 = vadd.f32 %v412, %v510
    %v543 = vadd.f32 %v413, %v511
    %v544 = vadd.f32 %v414, %v512
    %v545 = vadd.f32 %v415, %v513
    %v546 = vadd.f32 %v416, %v514
    %v547 = vadd.f32 %v417, %v515
    %v548 = vadd.f32 %v418, %v516
    %v549 = vadd.f32 %v419, %v517
    %v550 = vmul.f32 %v518, -1.0
    %v551 = vmul.f32 %v519, -1.0
    %v552 = vmul.f32 %v520, -1.0
    %v553 = vmul.f32 %v521, -1.0
    %v554 = vmul.f32 %v522, -1.0
    %v555 = vmul.f32 %v523, -1.0
    %v556 = vmul.f32 %v524, -1.0
    %v557 = vmul.f32 %v525, -1.0
    %v558 = vmul.f32 %v526, -1.0
    %v559 = vmul.f32 %v527, -1.0
    %v560 = vmul.f32 %v528, -1.0
    %v561 = vmul.f32 %v529, -1.0
    %v562 = vmul.f32 %v530, -1.0
    %v563 = vmul.f32 %v531, -1.0
    %v564 = vmul.f32 %v532, -1.0
    %v565 = vmul.f32 %v533, -1.0
    %v566 = vmul.f32 %v534, -0.05
    %v567 = vmul.f32 %v535, -0.05
    %v568 = vmul.f32 %v536, -0.05
    %v569 = vmul.f32 %v537, -0.05
    %v570 = vmul.f32 %v538, -0.05
    %v571 = vmul.f32 %v539, -0.05
    %v572 = vmul.f32 %v540, -0.05
    %v573 = vmul.f32 %v541, -0.05
    %v574 = vmul.f32 %v542, -0.05
    %v575 = vmul.f32 %v543, -0.05
    %v576 = vmul.f32 %v544, -0.05
    %v577 = vmul.f32 %v545, -0.05
    %v578 = vmul.f32 %v546, -0.05
    %v579 = vmul.f32 %v547, -0.05
    %v580 = vmul.f32 %v548, -0.05
    %v581 = vmul.f32 %v549, -0.05
    %v582 = vadd.f32 %v550, %v566
    %v583 = vadd.f32 %v551, %v567
    %v584 = vadd.f32 %v552, %v568
    %v585 = vadd.f32 %v553, %v569
    %v586 = vadd.f32 %v554, %v570
    %v587 = vadd.f32 %v555, %v571
    %v588 = vadd.f32 %v556, %v572
    %v589 = vadd.f32 %v557, %v573
    %v590 = vadd.f32 %v558, %v574
    %v591 = vadd.f32 %v559, %v575
    %v592 = vadd.f32 %v560, %v576
    %v593 = vadd.f32 %v561, %v577
    %v594 = vadd.f32 %v562, %v578
    %v595 = vadd.f32 %v563, %v579
    %v596 = vadd.f32 %v564, %v580
    %v597 = vadd.f32 %v565, %v581
    %s598 = scalar_lea.vmem %s3, %s28
    %vm599 = vcmask 261120
    %600 = vst.msk [vmem:[%s598] sm:$0xff] %vm599, %v582
    %601 = vst.msk [vmem:[%s598 + $0x8] sm:$0xff] %vm599, %v583
    %602 = vst.msk [vmem:[%s598 + $0x10] sm:$0xff] %vm599, %v584
    %603 = vst.msk [vmem:[%s598 + $0x18] sm:$0xff] %vm599, %v585
    %604 = vst.msk [vmem:[%s598 + $0x20] sm:$0xff] %vm599, %v586
    %605 = vst.msk [vmem:[%s598 + $0x28] sm:$0xff] %vm599, %v587
    %606 = vst.msk [vmem:[%s598 + $0x30] sm:$0xff] %vm599, %v588
    %607 = vst.msk [vmem:[%s598 + $0x38] sm:$0xff] %vm599, %v589
    %608 = vst.msk [vmem:[%s598 + $0x40] sm:$0xff] %vm599, %v590
    %609 = vst.msk [vmem:[%s598 + $0x48] sm:$0xff] %vm599, %v591
    %610 = vst.msk [vmem:[%s598 + $0x50] sm:$0xff] %vm599, %v592
    %611 = vst.msk [vmem:[%s598 + $0x58] sm:$0xff] %vm599, %v593
    %612 = vst.msk [vmem:[%s598 + $0x60] sm:$0xff] %vm599, %v594
    %613 = vst.msk [vmem:[%s598 + $0x68] sm:$0xff] %vm599, %v595
    %614 = vst.msk [vmem:[%s598 + $0x70] sm:$0xff] %vm599, %v596
    %615 = vst.msk [vmem:[%s598 + $0x78] sm:$0xff] %vm599, %v597
  $region18: #{tpu_custom_call.1} parent=0 // loop_footer
    %s27 = sadd.s32 1, %s23
  $region19: #{tpu_custom_call.1} parent=0 // loop_footer_branch
    %22 = sbr.rel target = $region15
  $region20: #{tpu_custom_call.1} parent=0 // loop_exit
    _
  // Predicated region
  $region21: #{tpu_custom_call.1} parent=0 // pred_check
    _
  $region22: #{tpu_custom_call.1} parent=0 // pred_check_branch
    %617 = sbr.rel (0) target = $region24
  $region23: #{tpu_custom_call.1} parent=0 // pred_region
    _
  $region24: #{tpu_custom_call.1} parent=0 // pred_fallthru
    _
  // Predicated region
  $region25: #{tpu_custom_call.1} parent=0 // pred_check
    _
  $region26: #{tpu_custom_call.1} parent=0 // pred_check_branch
    %619 = sbr.rel (0) target = $region28
  $region27: #{tpu_custom_call.1} parent=0 // pred_region
    _
  $region28: #{tpu_custom_call.1} parent=0 // pred_fallthru
    _

</llo_original>
